<compile_context>
chip_gen: v6e
topology: v6e:2x2x1
jax: 0.10.0
libtpu: 0.0.40
codegen_flags: <defaults>
</compile_context>

<pallas_src>
import functools

import jax
import jax.numpy as jnp
from jax.experimental import pallas as pl
from jax.experimental.pallas import tpu as pltpu

LANE = 128


def _round_up(x, m):
    return (x + m - 1) // m * m


def _pad2d(a, rows, cols, dtype):
    out = jnp.zeros((rows, cols), dtype=dtype)
    return out.at[: a.shape[0], : a.shape[1]].set(a.astype(dtype))


def gcn_layer_kernel(a_ref, x_ref, w_ref, b_ref, o_ref, acc_ref, *, activation):
    """One GCN layer, tiled:  out = act( (A_hat @ X) @ W + b ).

    Grid = (row tiles, node-reduction tiles); reduction axis is last.
    acc_ref accumulates the node aggregation (A_hat @ X) in f32; the small
    weight matmul + bias + activation run once on the final reduction step.
    """
    k = pl.program_id(1)

    @pl.when(k == 0)
    def _():
        acc_ref[...] = jnp.zeros_like(acc_ref)

    # acc += A_hat[row-tile, k-tile] @ X[k-tile, :]   (bf16 x bf16 -> f32 acc)
    acc_ref[...] += jnp.dot(
        a_ref[...], x_ref[...], preferred_element_type=jnp.float32
    )

    @pl.when(k == pl.num_programs(1) - 1)
    def _():
        agg = acc_ref[...].astype(w_ref.dtype)
        z = jnp.dot(agg, w_ref[...], preferred_element_type=jnp.float32) + b_ref[...]
        o_ref[...] = activation(z).astype(o_ref.dtype)


def _gcn_layer(a_hat, x, w, b, *, activation, out_dtype, tile):
    n_pad = a_hat.shape[0]
    f_pad = x.shape[1]
    o_pad = w.shape[1]
    kernel = functools.partial(gcn_layer_kernel, activation=activation)
    return pl.pallas_call(
        kernel,
        out_shape=jax.ShapeDtypeStruct((n_pad, o_pad), out_dtype),
        grid_spec=pltpu.PrefetchScalarGridSpec(
            num_scalar_prefetch=0,
            grid=(n_pad // tile, n_pad // tile),
            in_specs=[
                pl.BlockSpec((tile, tile), lambda i, k: (i, k)),    # A_hat tile
                pl.BlockSpec((tile, f_pad), lambda i, k: (k, 0)),   # X row tile
                pl.BlockSpec((f_pad, o_pad), lambda i, k: (0, 0)),  # W (whole)
                pl.BlockSpec((1, o_pad), lambda i, k: (0, 0)),      # bias
            ],
            out_specs=pl.BlockSpec((tile, o_pad), lambda i, k: (i, 0)),
            scratch_shapes=[pltpu.VMEM((tile, f_pad), jnp.float32)],
        ),
        compiler_params=pltpu.CompilerParams(
            dimension_semantics=("parallel", "arbitrary"),
            vmem_limit_bytes=64 * 1024 * 1024,
        ),
    )(a_hat, x, w, b)


@functools.partial(jax.jit, static_argnames=("tile",))
def gnn_model_forward(a_hat, x, w1, b1, w2, b2, *, tile=128):
    """GNNModel forward as two tiled Pallas calls.

    Operands are zero-padded to lane-dense shapes (multiples of 128) and cast
    to bf16 with f32 MXU accumulation. Padded nodes have zero A_hat rows/cols,
    so they never contribute to real rows; padded rows/cols are sliced off.
    """
    n = x.shape[0]
    out_dim = w2.shape[1]

    n_pad = _round_up(max(n, tile), tile)
    f_in_pad = _round_up(x.shape[1], LANE)
    h_pad = _round_up(w1.shape[1], LANE)
    f_out_pad = _round_up(out_dim, LANE)

    a_p = _pad2d(a_hat, n_pad, n_pad, jnp.bfloat16)
    x_p = _pad2d(x, n_pad, f_in_pad, jnp.bfloat16)
    w1_p = _pad2d(w1, f_in_pad, h_pad, jnp.bfloat16)
    b1_p = _pad2d(b1.reshape(1, -1), 1, h_pad, jnp.float32)
    w2_p = _pad2d(w2, h_pad, f_out_pad, jnp.bfloat16)
    b2_p = _pad2d(b2.reshape(1, -1), 1, f_out_pad, jnp.float32)

    # Layer 1: h = relu( (A_hat @ X) @ W1 + b1 ), kept lane-dense bf16 in HBM.
    h = _gcn_layer(
        a_p, x_p, w1_p, b1_p,
        activation=lambda z: jnp.maximum(z, 0.0),
        out_dtype=jnp.bfloat16, tile=tile,
    )
    # Layer 2: out = sigmoid( (A_hat @ h) @ W2 + b2 )
    out = _gcn_layer(
        a_p, h, w2_p, b2_p,
        activation=jax.nn.sigmoid,
        out_dtype=jnp.float32, tile=tile,
    )
    return out[:n, :out_dim]


def build_normalized_adjacency(edge_index, num_nodes):
    """Dense A_hat = D^{-1/2} (A + I) D^{-1/2}  (GCNConv default normalization).
    Graph setup is plain-JAX glue; the hot path stays in the kernels."""
    src, dst = edge_index[0], edge_index[1]
    a = jnp.zeros((num_nodes, num_nodes), dtype=jnp.float32)
    a = a.at[dst, src].add(1.0)                     # message flows src -> dst
    a = a + jnp.eye(num_nodes, dtype=jnp.float32)   # self loops
    deg = jnp.sum(a, axis=1)
    d_inv_sqrt = jnp.where(deg > 0, 1.0 / jnp.sqrt(deg), 0.0)
    return d_inv_sqrt[:, None] * a * d_inv_sqrt[None, :]


def glorot(key, shape):
    fan_in, fan_out = shape
    limit = jnp.sqrt(6.0 / (fan_in + fan_out))
    return jax.random.uniform(key, shape, jnp.float32, -limit, limit)


def reference(a_hat, x, w1, b1, w2, b2):
    h = jnp.maximum(a_hat @ (x @ w1) + b1[None, :], 0.0)
    return jax.nn.sigmoid(a_hat @ (h @ w2) + b2[None, :])


if __name__ == "__main__":
    # Small shapes consistent with the module's forward
    num_nodes = 16
    input_dim = 8
    hidden_dim = 32
    output_dim = 16

    key = jax.random.PRNGKey(0)
    k_x, k_w1, k_w2, k_x2, k_e2 = jax.random.split(key, 5)

    # Node features
    x = jax.random.normal(k_x, (num_nodes, input_dim), dtype=jnp.float32)

    # Deterministic edge_index: ring graph (both directions) -> (2, E)
    src = jnp.arange(num_nodes, dtype=jnp.int32)
    dst = (src + 1) % num_nodes
    edge_index = jnp.concatenate(
        [jnp.stack([src, dst]), jnp.stack([dst, src])], axis=1
    )
    batch = jnp.zeros((num_nodes,), dtype=jnp.int32)  # unused by forward  # noqa: F841

    # GCNConv parameters (glorot weights, zero bias)
    w1 = glorot(k_w1, (input_dim, hidden_dim))
    b1 = jnp.zeros((hidden_dim,), dtype=jnp.float32)
    w2 = glorot(k_w2, (hidden_dim, output_dim))
    b2 = jnp.zeros((output_dim,), dtype=jnp.float32)

    a_hat = build_normalized_adjacency(edge_index, num_nodes)

    out = gnn_model_forward(a_hat, x, w1, b1, w2, b2)
    out = jax.block_until_ready(out)

    out_ref = reference(a_hat, x, w1, b1, w2, b2)
    assert out.shape == (num_nodes, output_dim)
    assert jnp.allclose(out, out_ref, atol=3e-2, rtol=0.0), (
        float(jnp.max(jnp.abs(out - out_ref)))
    )

    # Second check exercising multiple row / reduction tiles (grid = (2, 2)).
    n2 = 200
    x2 = jax.random.normal(k_x2, (n2, input_dim), dtype=jnp.float32)
    e2 = jax.random.randint(k_e2, (2, 4 * n2), 0, n2, dtype=jnp.int32)
    a2 = build_normalized_adjacency(e2, n2)
    out2 = jax.block_until_ready(gnn_model_forward(a2, x2, w1, b1, w2, b2))
    out2_ref = reference(a2, x2, w1, b1, w2, b2)
    assert out2.shape == (n2, output_dim)
    assert jnp.allclose(out2, out2_ref, atol=3e-2, rtol=0.0), (
        float(jnp.max(jnp.abs(out2 - out2_ref)))
    )

    print("KERNEL_OK")
</pallas_src>

<mosaic_0001>
module attributes {stable_mosaic.version = 11 : i64} {
  func.func @gcn_layer_kernel(%arg0: i32, %arg1: i32, %arg2: memref<128x128xbf16, #tpu.memory_space<vmem>>, %arg3: memref<128x128xbf16, #tpu.memory_space<vmem>>, %arg4: memref<128x128xbf16, #tpu.memory_space<vmem>>, %arg5: memref<1x128xf32, #tpu.memory_space<vmem>>, %arg6: memref<128x128xbf16, #tpu.memory_space<vmem>>, %arg7: memref<128x128xf32, #tpu.memory_space<vmem>>) attributes {dimension_semantics = [#tpu.dimension_semantics<parallel>, #tpu.dimension_semantics<arbitrary>], iteration_bounds = array<i64: 1, 1>, scalar_prefetch = 0 : i64, scratch_operands = 1 : i64, tpu.core_type = #tpu.core_type<tc>, window_params = [{transform_indices = @transform_0, window_bounds = array<i64: 128, 128>}, {transform_indices = @transform_1, window_bounds = array<i64: 128, 128>}, {pipeline_mode = #tpu.pipeline_mode<synchronous>, transform_indices = @transform_2, window_bounds = array<i64: 128, 128>}, {pipeline_mode = #tpu.pipeline_mode<synchronous>, transform_indices = @transform_3, window_bounds = array<i64: 1, 128>}, {transform_indices = @transform_4, window_bounds = array<i64: 128, 128>}]} {
    %c0_i32 = arith.constant 0 : i32
    %0 = arith.cmpi eq, %arg1, %c0_i32 : i32
    %1 = arith.extui %0 : i1 to i32
    %c0_i32_0 = arith.constant 0 : i32
    %2 = arith.cmpi ne, %1, %c0_i32_0 : i32
    scf.if %2 {
      %cst_10 = arith.constant 0.000000e+00 : f32
      %12 = vector.broadcast %cst_10 : f32 to vector<128x128xf32>
      %c0_11 = arith.constant 0 : index
      %c0_12 = arith.constant 0 : index
      %13 = vector.load %arg7[%c0_11, %c0_12] : memref<128x128xf32, #tpu.memory_space<vmem>>, vector<128x128xf32>
      tpu.vector_store %arg7[%c0_11, %c0_12], %12 {strides = array<i32>} : memref<128x128xf32, #tpu.memory_space<vmem>>, vector<128x128xf32>,
    } else {
    }
    %c0 = arith.constant 0 : index
    %c0_1 = arith.constant 0 : index
    %3 = vector.load %arg7[%c0, %c0_1] : memref<128x128xf32, #tpu.memory_space<vmem>>, vector<128x128xf32>
    %c0_2 = arith.constant 0 : index
    %c0_3 = arith.constant 0 : index
    %4 = vector.load %arg2[%c0_2, %c0_3] : memref<128x128xbf16, #tpu.memory_space<vmem>>, vector<128x128xbf16>
    %c0_4 = arith.constant 0 : index
    %c0_5 = arith.constant 0 : index
    %5 = vector.load %arg3[%c0_4, %c0_5] : memref<128x128xbf16, #tpu.memory_space<vmem>>, vector<128x128xbf16>
    %cst = arith.constant dense<0.000000e+00> : vector<128x128xf32>
    %6 = tpu.matmul %4, %5, %cst {dimension_numbers = #tpu.dot_dimension_numbers<[1], [0], [0], [1], [0, 0, 1, 1], [], []>} : vector<128x128xbf16>, vector<128x128xbf16>, vector<128x128xf32> -> vector<128x128xf32>
    %7 = arith.addf %3, %6 : vector<128x128xf32>
    %c0_6 = arith.constant 0 : index
    %c0_7 = arith.constant 0 : index
    %8 = vector.load %arg7[%c0_6, %c0_7] : memref<128x128xf32, #tpu.memory_space<vmem>>, vector<128x128xf32>
    tpu.vector_store %arg7[%c0_6, %c0_7], %7 {strides = array<i32>} : memref<128x128xf32, #tpu.memory_space<vmem>>, vector<128x128xf32>,
    %c0_i32_8 = arith.constant 0 : i32
    %9 = arith.cmpi eq, %arg1, %c0_i32_8 : i32
    %10 = arith.extui %9 : i1 to i32
    %c0_i32_9 = arith.constant 0 : i32
    %11 = arith.cmpi ne, %10, %c0_i32_9 : i32
    scf.if %11 {
      %c0_10 = arith.constant 0 : index
      %c0_11 = arith.constant 0 : index
      %12 = vector.load %arg7[%c0_10, %c0_11] : memref<128x128xf32, #tpu.memory_space<vmem>>, vector<128x128xf32>
      %13 = arith.truncf %12 : vector<128x128xf32> to vector<128x128xbf16>
      %c0_12 = arith.constant 0 : index
      %c0_13 = arith.constant 0 : index
      %14 = vector.load %arg4[%c0_12, %c0_13] : memref<128x128xbf16, #tpu.memory_space<vmem>>, vector<128x128xbf16>
      %cst_14 = arith.constant dense<0.000000e+00> : vector<128x128xf32>
      %15 = tpu.matmul %13, %14, %cst_14 {dimension_numbers = #tpu.dot_dimension_numbers<[1], [0], [0], [1], [0, 0, 1, 1], [], []>} : vector<128x128xbf16>, vector<128x128xbf16>, vector<128x128xf32> -> vector<128x128xf32>
      %c0_15 = arith.constant 0 : index
      %c0_16 = arith.constant 0 : index
      %16 = vector.load %arg5[%c0_15, %c0_16] : memref<1x128xf32, #tpu.memory_space<vmem>>, vector<1x128xf32>
      %17 = vector.broadcast %16 : vector<1x128xf32> to vector<128x128xf32>
      %18 = arith.addf %15, %17 : vector<128x128xf32>
      %cst_17 = arith.constant 0.000000e+00 : f32
      %19 = vector.broadcast %cst_17 : f32 to vector<128x128xf32>
      %20 = arith.maximumf %18, %19 : vector<128x128xf32>
      %21 = arith.truncf %20 : vector<128x128xf32> to vector<128x128xbf16>
      %c0_18 = arith.constant 0 : index
      %c0_19 = arith.constant 0 : index
      %22 = vector.load %arg6[%c0_18, %c0_19] : memref<128x128xbf16, #tpu.memory_space<vmem>>, vector<128x128xbf16>
      tpu.vector_store %arg6[%c0_18, %c0_19], %21 {strides = array<i32>} : memref<128x128xbf16, #tpu.memory_space<vmem>>, vector<128x128xbf16>,
    } else {
    }
    return
  }
  func.func @transform_0(%arg0: i32, %arg1: i32) -> (i32, i32) {
    %c0_i32 = arith.constant 0 : i32
    return %arg0, %arg1 : i32, i32
  }
  func.func @transform_1(%arg0: i32, %arg1: i32) -> (i32, i32) {
    %c0_i32 = arith.constant 0 : i32
    %c0_i32_0 = arith.constant 0 : i32
    return %arg1, %c0_i32 : i32, i32
  }
  func.func @transform_2(%arg0: i32, %arg1: i32) -> (i32, i32) {
    %c0_i32 = arith.constant 0 : i32
    %c0_i32_0 = arith.constant 0 : i32
    %c0_i32_1 = arith.constant 0 : i32
    return %c0_i32, %c0_i32_0 : i32, i32
  }
  func.func @transform_3(%arg0: i32, %arg1: i32) -> (i32, i32) {
    %c0_i32 = arith.constant 0 : i32
    %c0_i32_0 = arith.constant 0 : i32
    %c0_i32_1 = arith.constant 0 : i32
    return %c0_i32, %c0_i32_0 : i32, i32
  }
  func.func @transform_4(%arg0: i32, %arg1: i32) -> (i32, i32) {
    %c0_i32 = arith.constant 0 : i32
    %c0_i32_0 = arith.constant 0 : i32
    return %arg0, %c0_i32 : i32, i32
  }
}

module attributes {stable_mosaic.version = 11 : i64} {
  func.func @gcn_layer_kernel(%arg0: i32, %arg1: i32, %arg2: memref<128x128xbf16, #tpu.memory_space<vmem>>, %arg3: memref<128x128xbf16, #tpu.memory_space<vmem>>, %arg4: memref<128x128xbf16, #tpu.memory_space<vmem>>, %arg5: memref<1x128xf32, #tpu.memory_space<vmem>>, %arg6: memref<128x128xf32, #tpu.memory_space<vmem>>, %arg7: memref<128x128xf32, #tpu.memory_space<vmem>>) attributes {dimension_semantics = [#tpu.dimension_semantics<parallel>, #tpu.dimension_semantics<arbitrary>], iteration_bounds = array<i64: 1, 1>, scalar_prefetch = 0 : i64, scratch_operands = 1 : i64, tpu.core_type = #tpu.core_type<tc>, window_params = [{transform_indices = @transform_0, window_bounds = array<i64: 128, 128>}, {transform_indices = @transform_1, window_bounds = array<i64: 128, 128>}, {pipeline_mode = #tpu.pipeline_mode<synchronous>, transform_indices = @transform_2, window_bounds = array<i64: 128, 128>}, {pipeline_mode = #tpu.pipeline_mode<synchronous>, transform_indices = @transform_3, window_bounds = array<i64: 1, 128>}, {transform_indices = @transform_4, window_bounds = array<i64: 128, 128>}]} {
    %c0_i32 = arith.constant 0 : i32
    %0 = arith.cmpi eq, %arg1, %c0_i32 : i32
    %1 = arith.extui %0 : i1 to i32
    %c0_i32_0 = arith.constant 0 : i32
    %2 = arith.cmpi ne, %1, %c0_i32_0 : i32
    scf.if %2 {
      %cst_10 = arith.constant 0.000000e+00 : f32
      %12 = vector.broadcast %cst_10 : f32 to vector<128x128xf32>
      %c0_11 = arith.constant 0 : index
      %c0_12 = arith.constant 0 : index
      %13 = vector.load %arg7[%c0_11, %c0_12] : memref<128x128xf32, #tpu.memory_space<vmem>>, vector<128x128xf32>
      tpu.vector_store %arg7[%c0_11, %c0_12], %12 {strides = array<i32>} : memref<128x128xf32, #tpu.memory_space<vmem>>, vector<128x128xf32>,
    } else {
    }
    %c0 = arith.constant 0 : index
    %c0_1 = arith.constant 0 : index
    %3 = vector.load %arg7[%c0, %c0_1] : memref<128x128xf32, #tpu.memory_space<vmem>>, vector<128x128xf32>
    %c0_2 = arith.constant 0 : index
    %c0_3 = arith.constant 0 : index
    %4 = vector.load %arg2[%c0_2, %c0_3] : memref<128x128xbf16, #tpu.memory_space<vmem>>, vector<128x128xbf16>
    %c0_4 = arith.constant 0 : index
    %c0_5 = arith.constant 0 : index
    %5 = vector.load %arg3[%c0_4, %c0_5] : memref<128x128xbf16, #tpu.memory_space<vmem>>, vector<128x128xbf16>
    %cst = arith.constant dense<0.000000e+00> : vector<128x128xf32>
    %6 = tpu.matmul %4, %5, %cst {dimension_numbers = #tpu.dot_dimension_numbers<[1], [0], [0], [1], [0, 0, 1, 1], [], []>} : vector<128x128xbf16>, vector<128x128xbf16>, vector<128x128xf32> -> vector<128x128xf32>
    %7 = arith.addf %3, %6 : vector<128x128xf32>
    %c0_6 = arith.constant 0 : index
    %c0_7 = arith.constant 0 : index
    %8 = vector.load %arg7[%c0_6, %c0_7] : memref<128x128xf32, #tpu.memory_space<vmem>>, vector<128x128xf32>
    tpu.vector_store %arg7[%c0_6, %c0_7], %7 {strides = array<i32>} : memref<128x128xf32, #tpu.memory_space<vmem>>, vector<128x128xf32>,
    %c0_i32_8 = arith.constant 0 : i32
    %9 = arith.cmpi eq, %arg1, %c0_i32_8 : i32
    %10 = arith.extui %9 : i1 to i32
    %c0_i32_9 = arith.constant 0 : i32
    %11 = arith.cmpi ne, %10, %c0_i32_9 : i32
    scf.if %11 {
      %c0_10 = arith.constant 0 : index
      %c0_11 = arith.constant 0 : index
      %12 = vector.load %arg7[%c0_10, %c0_11] : memref<128x128xf32, #tpu.memory_space<vmem>>, vector<128x128xf32>
      %13 = arith.truncf %12 : vector<128x128xf32> to vector<128x128xbf16>
      %c0_12 = arith.constant 0 : index
      %c0_13 = arith.constant 0 : index
      %14 = vector.load %arg4[%c0_12, %c0_13] : memref<128x128xbf16, #tpu.memory_space<vmem>>, vector<128x128xbf16>
      %cst_14 = arith.constant dense<0.000000e+00> : vector<128x128xf32>
      %15 = tpu.matmul %13, %14, %cst_14 {dimension_numbers = #tpu.dot_dimension_numbers<[1], [0], [0], [1], [0, 0, 1, 1], [], []>} : vector<128x128xbf16>, vector<128x128xbf16>, vector<128x128xf32> -> vector<128x128xf32>
      %c0_15 = arith.constant 0 : index
      %c0_16 = arith.constant 0 : index
      %16 = vector.load %arg5[%c0_15, %c0_16] : memref<1x128xf32, #tpu.memory_space<vmem>>, vector<1x128xf32>
      %17 = vector.broadcast %16 : vector<1x128xf32> to vector<128x128xf32>
      %18 = arith.addf %15, %17 : vector<128x128xf32>
      %19 = arith.negf %18 : vector<128x128xf32>
      %20 = math.exp %19 : vector<128x128xf32>
      %cst_17 = arith.constant 1.000000e+00 : f32
      %21 = vector.broadcast %cst_17 : f32 to vector<128x128xf32>
      %22 = arith.addf %21, %20 : vector<128x128xf32>
      %23 = arith.divf %21, %22 : vector<128x128xf32>
      %c0_18 = arith.constant 0 : index
      %c0_19 = arith.constant 0 : index
      %24 = vector.load %arg6[%c0_18, %c0_19] : memref<128x128xf32, #tpu.memory_space<vmem>>, vector<128x128xf32>
      tpu.vector_store %arg6[%c0_18, %c0_19], %23 {strides = array<i32>} : memref<128x128xf32, #tpu.memory_space<vmem>>, vector<128x128xf32>,
    } else {
    }
    return
  }
  func.func @transform_0(%arg0: i32, %arg1: i32) -> (i32, i32) {
    %c0_i32 = arith.constant 0 : i32
    return %arg0, %arg1 : i32, i32
  }
  func.func @transform_1(%arg0: i32, %arg1: i32) -> (i32, i32) {
    %c0_i32 = arith.constant 0 : i32
    %c0_i32_0 = arith.constant 0 : i32
    return %arg1, %c0_i32 : i32, i32
  }
  func.func @transform_2(%arg0: i32, %arg1: i32) -> (i32, i32) {
    %c0_i32 = arith.constant 0 : i32
    %c0_i32_0 = arith.constant 0 : i32
    %c0_i32_1 = arith.constant 0 : i32
    return %c0_i32, %c0_i32_0 : i32, i32
  }
  func.func @transform_3(%arg0: i32, %arg1: i32) -> (i32, i32) {
    %c0_i32 = arith.constant 0 : i32
    %c0_i32_0 = arith.constant 0 : i32
    %c0_i32_1 = arith.constant 0 : i32
    return %c0_i32, %c0_i32_0 : i32, i32
  }
  func.func @transform_4(%arg0: i32, %arg1: i32) -> (i32, i32) {
    %c0_i32 = arith.constant 0 : i32
    %c0_i32_0 = arith.constant 0 : i32
    return %arg0, %c0_i32 : i32, i32
  }
}

</mosaic_0001>

<llo_original>
// kernel: gnn_model_forward.3
$region0: #{gnn_model_forward.3}
  #allocation0 [shape = 'u32[]', space=smem, size = 0x4, offset = 0x4, fixed_abs, tag = 'smem constant byte address 0x4 - core index']
  #allocation1 [shape = 'u32[144,128]{1,0:T(1,128)}', space=vmem, size = 0x12000, scoped, tag = 'internal scratch']
  #allocation2 [shape = 'f32[128,128]{1,0:T(8,128)}', space=vmem, size = 0x10000, scoped, tag = 'scratch operand']
  %s0 = inlined_call_operand.vmem [shape: bf16[128,128], index: 0, kind: input, shape index: {}]
  %s1 = inlined_call_operand.vmem [shape: bf16[128,128], index: 1, kind: input, shape index: {}]
  %s2 = inlined_call_operand.vmem [shape: bf16[128,128], index: 2, kind: input, shape index: {}]
  %s3 = inlined_call_operand.vmem [shape: f32[1,128], index: 3, kind: input, shape index: {}]
  %s4 = inlined_call_operand.vmem [shape: f32[128,128], index: 4, kind: output, shape index: {}]
  %s5 = sld [smem:[#allocation0]]
  $region34: #{gnn_model_forward.3} parent=0
    _
  %s7 = ssub.s32 1, %s5
  %s8 = scalar_select 0, %s7, %s5
  // Predicated region
  $region2: #{gnn_model_forward.3} parent=0 // pred_check
    _
  $region3: #{gnn_model_forward.3} parent=0 // pred_check_branch
    %10 = sbr.rel (0) target = $region5
  $region4: #{gnn_model_forward.3} parent=0 // pred_region
    _
  $region5: #{gnn_model_forward.3} parent=0 // pred_fallthru
    _
  // Predicated region
  $region6: #{gnn_model_forward.3} parent=0 // pred_check
    _
  $region7: #{gnn_model_forward.3} parent=0 // pred_check_branch
    %12 = sbr.rel (0) target = $region9
  $region8: #{gnn_model_forward.3} parent=0 // pred_region
    _
  $region9: #{gnn_model_forward.3} parent=0 // pred_fallthru
    _
  // Predicated region
  $region10: #{gnn_model_forward.3} parent=0 // pred_check
    _
  $region11: #{gnn_model_forward.3} parent=0 // pred_check_branch
    %14 = sbr.rel (0) target = $region13
  $region12: #{gnn_model_forward.3} parent=0 // pred_region
    _
  $region13: #{gnn_model_forward.3} parent=0 // pred_fallthru
    _
  // Predicated region
  $region14: #{gnn_model_forward.3} parent=0 // pred_check
    _
  $region15: #{gnn_model_forward.3} parent=0 // pred_check_branch
    %16 = sbr.rel (0) target = $region17
  $region16: #{gnn_model_forward.3} parent=0 // pred_region
    _
  $region17: #{gnn_model_forward.3} parent=0 // pred_fallthru
    _
  %p18 = scmp.eq.s32.totalorder 0, 0
  // Predicated region
  $region18: #{gnn_model_forward.3} parent=0 // pred_check
    %p19 = pneg %p18
  $region19: #{gnn_model_forward.3} parent=0 // pred_check_branch
    %21 = sbr.rel (%p19) target = $region21
  $region20: #{gnn_model_forward.3} parent=0 // pred_region
    %22 = vst [vmem:[#allocation2] sm:$0xff] 0.0
    %23 = vst [vmem:[#allocation2 + $0x8] sm:$0xff] 0.0
    %24 = vst [vmem:[#allocation2 + $0x10] sm:$0xff] 0.0
    %25 = vst [vmem:[#allocation2 + $0x18] sm:$0xff] 0.0
    %26 = vst [vmem:[#allocation2 + $0x20] sm:$0xff] 0.0
    %27 = vst [vmem:[#allocation2 + $0x28] sm:$0xff] 0.0
    %28 = vst [vmem:[#allocation2 + $0x30] sm:$0xff] 0.0
    %29 = vst [vmem:[#allocation2 + $0x38] sm:$0xff] 0.0
    %30 = vst [vmem:[#allocation2 + $0x40] sm:$0xff] 0.0
    %31 = vst [vmem:[#allocation2 + $0x48] sm:$0xff] 0.0
    %32 = vst [vmem:[#allocation2 + $0x50] sm:$0xff] 0.0
    %33 = vst [vmem:[#allocation2 + $0x58] sm:$0xff] 0.0
    %34 = vst [vmem:[#allocation2 + $0x60] sm:$0xff] 0.0
    %35 = vst [vmem:[#allocation2 + $0x68] sm:$0xff] 0.0
    %36 = vst [vmem:[#allocation2 + $0x70] sm:$0xff] 0.0
    %37 = vst [vmem:[#allocation2 + $0x78] sm:$0xff] 0.0
  $region21: #{gnn_model_forward.3} parent=0 // pred_fallthru
    _
  %v38 = vld [vmem:[#allocation2] sm:$0xff]
  %v39 = vld [vmem:[#allocation2 + $0x8] sm:$0xff]
  %v40 = vld [vmem:[#allocation2 + $0x10] sm:$0xff]
  %v41 = vld [vmem:[#allocation2 + $0x18] sm:$0xff]
  %v42 = vld [vmem:[#allocation2 + $0x20] sm:$0xff]
  %v43 = vld [vmem:[#allocation2 + $0x28] sm:$0xff]
  %v44 = vld [vmem:[#allocation2 + $0x30] sm:$0xff]
  %v45 = vld [vmem:[#allocation2 + $0x38] sm:$0xff]
  %v46 = vld [vmem:[#allocation2 + $0x40] sm:$0xff]
  %v47 = vld [vmem:[#allocation2 + $0x48] sm:$0xff]
  %v48 = vld [vmem:[#allocation2 + $0x50] sm:$0xff]
  %v49 = vld [vmem:[#allocation2 + $0x58] sm:$0xff]
  %v50 = vld [vmem:[#allocation2 + $0x60] sm:$0xff]
  %v51 = vld [vmem:[#allocation2 + $0x68] sm:$0xff]
  %v52 = vld [vmem:[#allocation2 + $0x70] sm:$0xff]
  %v53 = vld [vmem:[#allocation2 + $0x78] sm:$0xff]
  %v54 = vld [vmem:[%s0] sm:$0xf]
  %v55 = vld [vmem:[%s0 + $0x4] sm:$0xf]
  %v56 = vld [vmem:[%s0 + $0x8] sm:$0xf]
  %v57 = vld [vmem:[%s0 + $0xc] sm:$0xf]
  %v58 = vld [vmem:[%s0 + $0x10] sm:$0xf]
  %v59 = vld [vmem:[%s0 + $0x14] sm:$0xf]
  %v60 = vld [vmem:[%s0 + $0x18] sm:$0xf]
  %v61 = vld [vmem:[%s0 + $0x1c] sm:$0xf]
  %v62 = vld [vmem:[%s0 + $0x20] sm:$0xf]
  %v63 = vld [vmem:[%s0 + $0x24] sm:$0xf]
  %v64 = vld [vmem:[%s0 + $0x28] sm:$0xf]
  %v65 = vld [vmem:[%s0 + $0x2c] sm:$0xf]
  %v66 = vld [vmem:[%s0 + $0x30] sm:$0xf]
  %v67 = vld [vmem:[%s0 + $0x34] sm:$0xf]
  %v68 = vld [vmem:[%s0 + $0x38] sm:$0xf]
  %v69 = vld [vmem:[%s0 + $0x3c] sm:$0xf]
  %v70 = vld [vmem:[%s1] sm:$0xf]
  %v71 = vld [vmem:[%s1 + $0x4] sm:$0xf]
  %v72 = vld [vmem:[%s1 + $0x8] sm:$0xf]
  %v73 = vld [vmem:[%s1 + $0xc] sm:$0xf]
  %v74 = vld [vmem:[%s1 + $0x10] sm:$0xf]
  %v75 = vld [vmem:[%s1 + $0x14] sm:$0xf]
  %v76 = vld [vmem:[%s1 + $0x18] sm:$0xf]
  %v77 = vld [vmem:[%s1 + $0x1c] sm:$0xf]
  %v78 = vld [vmem:[%s1 + $0x20] sm:$0xf]
  %v79 = vld [vmem:[%s1 + $0x24] sm:$0xf]
  %v80 = vld [vmem:[%s1 + $0x28] sm:$0xf]
  %v81 = vld [vmem:[%s1 + $0x2c] sm:$0xf]
  %v82 = vld [vmem:[%s1 + $0x30] sm:$0xf]
  %v83 = vld [vmem:[%s1 + $0x34] sm:$0xf]
  %v84 = vld [vmem:[%s1 + $0x38] sm:$0xf]
  %v85 = vld [vmem:[%s1 + $0x3c] sm:$0xf]
  %v102 = vunpack.c.l.b16 %v54
  %v103 = vunpack.c.l.b16 %v55
  %v104 = vunpack.c.l.b16 %v56
  %v105 = vunpack.c.l.b16 %v57
  %v106 = vunpack.c.l.b16 %v58
  %v107 = vunpack.c.l.b16 %v59
  %v108 = vunpack.c.l.b16 %v60
  %v109 = vunpack.c.l.b16 %v61
  %v110 = vunpack.c.l.b16 %v62
  %v111 = vunpack.c.l.b16 %v63
  %v112 = vunpack.c.l.b16 %v64
  %v113 = vunpack.c.l.b16 %v65
  %v114 = vunpack.c.l.b16 %v66
  %v115 = vunpack.c.l.b16 %v67
  %v116 = vunpack.c.l.b16 %v68
  %v117 = vunpack.c.l.b16 %v69
  %v118 = vpack.c.b16 %v103, %v102
  %v119 = vpack.c.b16 %v105, %v104
  %v120 = vpack.c.b16 %v107, %v106
  %v121 = vpack.c.b16 %v109, %v108
  %v122 = vpack.c.b16 %v111, %v110
  %v123 = vpack.c.b16 %v113, %v112
  %v124 = vpack.c.b16 %v115, %v114
  %v125 = vpack.c.b16 %v117, %v116
  %v150 = vunpack.c.l.b16 %v70
  %v151 = vunpack.c.l.b16 %v71
  %v152 = vunpack.c.l.b16 %v72
  %v153 = vunpack.c.l.b16 %v73
  %v154 = vunpack.c.l.b16 %v74
  %v155 = vunpack.c.l.b16 %v75
  %v156 = vunpack.c.l.b16 %v76
  %v157 = vunpack.c.l.b16 %v77
  %v158 = vunpack.c.l.b16 %v78
  %v159 = vunpack.c.l.b16 %v79
  %v160 = vunpack.c.l.b16 %v80
  %v161 = vunpack.c.l.b16 %v81
  %v162 = vunpack.c.l.b16 %v82
  %v163 = vunpack.c.l.b16 %v83
  %v164 = vunpack.c.l.b16 %v84
  %v165 = vunpack.c.l.b16 %v85
  %v166 = vpack.c.b16 %v151, %v150
  %v167 = vpack.c.b16 %v153, %v152
  %v168 = vpack.c.b16 %v155, %v154
  %v169 = vpack.c.b16 %v157, %v156
  %v170 = vpack.c.b16 %v159, %v158
  %v171 = vpack.c.b16 %v161, %v160
  %v172 = vpack.c.b16 %v163, %v162
  %v173 = vpack.c.b16 %v165, %v164
  %182 = vmatprep.subr.bf16.mxu0 0
  %183 = vmatpush1.bf16.msra.mxu0 %v173
  %184 = vmatprep.subr.bf16.mxu0 0
  %185 = vmatpush1.bf16.msra.mxu0 %v172
  %186 = vmatprep.subr.bf16.mxu0 0
  %187 = vmatpush1.bf16.msra.mxu0 %v171
  %188 = vmatprep.subr.bf16.mxu0 0
  %189 = vmatpush1.bf16.msra.mxu0 %v170
  %190 = vmatprep.subr.bf16.mxu0 0
  %191 = vmatpush1.bf16.msra.mxu0 %v169
  %192 = vmatprep.subr.bf16.mxu0 0
  %193 = vmatpush1.bf16.msra.mxu0 %v168
  %194 = vmatprep.subr.bf16.mxu0 0
  %195 = vmatpush1.bf16.msra.mxu0 %v167
  %196 = vmatprep.subr.bf16.mxu0 0
  %197 = vmatpush1.bf16.msra.mxu0 %v166
  %198 = vmatprep.subr.bf16.mxu0 0
  %199 = vmatpush2.bf16.msra.mxu0 0
  %200 = vmatprep.subr.bf16.mxu0 0
  %201 = vmatpush2.bf16.msra.mxu0 0
  %202 = vmatprep.subr.bf16.mxu0 0
  %203 = vmatpush2.bf16.msra.mxu0 0
  %204 = vmatprep.subr.bf16.mxu0 0
  %205 = vmatpush2.bf16.msra.mxu0 0
  %206 = vmatprep.subr.bf16.mxu0 0
  %207 = vmatpush2.bf16.msra.mxu0 0
  %208 = vmatprep.subr.bf16.mxu0 0
  %209 = vmatpush2.bf16.msra.mxu0 0
  %210 = vmatprep.subr.bf16.mxu0 0
  %211 = vmatpush2.bf16.msra.mxu0 0
  %212 = vmatprep.subr.bf16.mxu0 0
  %213 = vmatpush2.bf16.msra.mxu0 0
  %214 = vmatprep.mubr.bf16.mxu0 0
  %215 = vmatmul.mubr.bf16.gmra.mxu0 %v118
  %v216 = vpop.f32.mrf.mxu0
  %v217 = vadd.f32 0.0, %v216
  %v218 = vpop.f32.mrf.mxu0
  %v219 = vpop.f32.mrf.mxu0
  %v220 = vadd.f32 0.0, %v219
  %v221 = vpop.f32.mrf.mxu0
  %222 = vmatprep.mubr.bf16.mxu0 0
  %223 = vmatmul.mubr.bf16.gmra.mxu0 %v119
  %v224 = vpop.f32.mrf.mxu0
  %v225 = vadd.f32 0.0, %v224
  %v226 = vpop.f32.mrf.mxu0
  %v227 = vpop.f32.mrf.mxu0
  %v228 = vadd.f32 0.0, %v227
  %v229 = vpop.f32.mrf.mxu0
  %230 = vmatprep.mubr.bf16.mxu0 0
  %231 = vmatmul.mubr.bf16.gmra.mxu0 %v120
  %v232 = vpop.f32.mrf.mxu0
  %v233 = vadd.f32 0.0, %v232
  %v234 = vpop.f32.mrf.mxu0
  %v235 = vpop.f32.mrf.mxu0
  %v236 = vadd.f32 0.0, %v235
  %v237 = vpop.f32.mrf.mxu0
  %238 = vmatprep.mubr.bf16.mxu0 0
  %239 = vmatmul.mubr.bf16.gmra.mxu0 %v121
  %v240 = vpop.f32.mrf.mxu0
  %v241 = vadd.f32 0.0, %v240
  %v242 = vpop.f32.mrf.mxu0
  %v243 = vpop.f32.mrf.mxu0
  %v244 = vadd.f32 0.0, %v243
  %v245 = vpop.f32.mrf.mxu0
  %246 = vmatprep.mubr.bf16.mxu0 0
  %247 = vmatmul.mubr.bf16.gmra.mxu0 %v122
  %v248 = vpop.f32.mrf.mxu0
  %v249 = vadd.f32 0.0, %v248
  %v250 = vpop.f32.mrf.mxu0
  %v251 = vpop.f32.mrf.mxu0
  %v252 = vadd.f32 0.0, %v251
  %v253 = vpop.f32.mrf.mxu0
  %254 = vmatprep.mubr.bf16.mxu0 0
  %255 = vmatmul.mubr.bf16.gmra.mxu0 %v123
  %v256 = vpop.f32.mrf.mxu0
  %v257 = vadd.f32 0.0, %v256
  %v258 = vpop.f32.mrf.mxu0
  %v259 = vpop.f32.mrf.mxu0
  %v260 = vadd.f32 0.0, %v259
  %v261 = vpop.f32.mrf.mxu0
  %262 = vmatprep.mubr.bf16.mxu0 0
  %263 = vmatmul.mubr.bf16.gmra.mxu0 %v124
  %v264 = vpop.f32.mrf.mxu0
  %v265 = vadd.f32 0.0, %v264
  %v266 = vpop.f32.mrf.mxu0
  %v267 = vpop.f32.mrf.mxu0
  %v268 = vadd.f32 0.0, %v267
  %v269 = vpop.f32.mrf.mxu0
  %270 = vmatprep.mubr.bf16.mxu0 0
  %271 = vmatmul.mubr.bf16.gmra.mxu0 %v125
  %v272 = vpop.f32.mrf.mxu0
  %v273 = vadd.f32 0.0, %v272
  %v274 = vpop.f32.mrf.mxu0
  %v275 = vpop.f32.mrf.mxu0
  %v276 = vadd.f32 0.0, %v275
  %v277 = vpop.f32.mrf.mxu0
  %278 = vdwg.mxu0
  %v279 = vadd.f32 %v38, %v217
  %v280 = vadd.f32 %v39, %v220
  %v281 = vadd.f32 %v40, %v225
  %v282 = vadd.f32 %v41, %v228
  %v283 = vadd.f32 %v42, %v233
  %v284 = vadd.f32 %v43, %v236
  %v285 = vadd.f32 %v44, %v241
  %v286 = vadd.f32 %v45, %v244
  %v287 = vadd.f32 %v46, %v249
  %v288 = vadd.f32 %v47, %v252
  %v289 = vadd.f32 %v48, %v257
  %v290 = vadd.f32 %v49, %v260
  %v291 = vadd.f32 %v50, %v265
  %v292 = vadd.f32 %v51, %v268
  %v293 = vadd.f32 %v52, %v273
  %v294 = vadd.f32 %v53, %v276
  %295 = vst [vmem:[#allocation2] sm:$0xff] %v279
  %296 = vst [vmem:[#allocation2 + $0x8] sm:$0xff] %v280
  %297 = vst [vmem:[#allocation2 + $0x10] sm:$0xff] %v281
  %298 = vst [vmem:[#allocation2 + $0x18] sm:$0xff] %v282
  %299 = vst [vmem:[#allocation2 + $0x20] sm:$0xff] %v283
  %300 = vst [vmem:[#allocation2 + $0x28] sm:$0xff] %v284
  %301 = vst [vmem:[#allocation2 + $0x30] sm:$0xff] %v285
  %302 = vst [vmem:[#allocation2 + $0x38] sm:$0xff] %v286
  %303 = vst [vmem:[#allocation2 + $0x40] sm:$0xff] %v287
  %304 = vst [vmem:[#allocation2 + $0x48] sm:$0xff] %v288
  %305 = vst [vmem:[#allocation2 + $0x50] sm:$0xff] %v289
  %306 = vst [vmem:[#allocation2 + $0x58] sm:$0xff] %v290
  %307 = vst [vmem:[#allocation2 + $0x60] sm:$0xff] %v291
  %308 = vst [vmem:[#allocation2 + $0x68] sm:$0xff] %v292
  %309 = vst [vmem:[#allocation2 + $0x70] sm:$0xff] %v293
  %310 = vst [vmem:[#allocation2 + $0x78] sm:$0xff] %v294
  // Predicated region
  $region22: #{gnn_model_forward.3} parent=0 // pred_check
    %p311 = pneg %p18
  $region23: #{gnn_model_forward.3} parent=0 // pred_check_branch
    %313 = sbr.rel (%p311) target = $region25
  $region24: #{gnn_model_forward.3} parent=0 // pred_region
    %v314 = vld [vmem:[#allocation2] sm:$0xff]
    %v315 = vld [vmem:[#allocation2 + $0x8] sm:$0xff]
    %v316 = vld [vmem:[#allocation2 + $0x10] sm:$0xff]
    %v317 = vld [vmem:[#allocation2 + $0x18] sm:$0xff]
    %v318 = vld [vmem:[#allocation2 + $0x20] sm:$0xff]
    %v319 = vld [vmem:[#allocation2 + $0x28] sm:$0xff]
    %v320 = vld [vmem:[#allocation2 + $0x30] sm:$0xff]
    %v321 = vld [vmem:[#allocation2 + $0x38] sm:$0xff]
    %v322 = vld [vmem:[#allocation2 + $0x40] sm:$0xff]
    %v323 = vld [vmem:[#allocation2 + $0x48] sm:$0xff]
    %v324 = vld [vmem:[#allocation2 + $0x50] sm:$0xff]
    %v325 = vld [vmem:[#allocation2 + $0x58] sm:$0xff]
    %v326 = vld [vmem:[#allocation2 + $0x60] sm:$0xff]
    %v327 = vld [vmem:[#allocation2 + $0x68] sm:$0xff]
    %v328 = vld [vmem:[#allocation2 + $0x70] sm:$0xff]
    %v329 = vld [vmem:[#allocation2 + $0x78] sm:$0xff]
    %v330 = vpack.c.bf16 %v315, %v314
    %v331 = vpack.c.bf16 %v317, %v316
    %v332 = vpack.c.bf16 %v319, %v318
    %v333 = vpack.c.bf16 %v321, %v320
    %v334 = vpack.c.bf16 %v323, %v322
    %v335 = vpack.c.bf16 %v325, %v324
    %v336 = vpack.c.bf16 %v327, %v326
    %v337 = vpack.c.bf16 %v329, %v328
    %v338 = vld [vmem:[%s2] sm:$0xf]
    %v339 = vld [vmem:[%s2 + $0x4] sm:$0xf]
    %v340 = vld [vmem:[%s2 + $0x8] sm:$0xf]
    %v341 = vld [vmem:[%s2 + $0xc] sm:$0xf]
    %v342 = vld [vmem:[%s2 + $0x10] sm:$0xf]
    %v343 = vld [vmem:[%s2 + $0x14] sm:$0xf]
    %v344 = vld [vmem:[%s2 + $0x18] sm:$0xf]
    %v345 = vld [vmem:[%s2 + $0x1c] sm:$0xf]
    %v346 = vld [vmem:[%s2 + $0x20] sm:$0xf]
    %v347 = vld [vmem:[%s2 + $0x24] sm:$0xf]
    %v348 = vld [vmem:[%s2 + $0x28] sm:$0xf]
    %v349 = vld [vmem:[%s2 + $0x2c] sm:$0xf]
    %v350 = vld [vmem:[%s2 + $0x30] sm:$0xf]
    %v351 = vld [vmem:[%s2 + $0x34] sm:$0xf]
    %v352 = vld [vmem:[%s2 + $0x38] sm:$0xf]
    %v353 = vld [vmem:[%s2 + $0x3c] sm:$0xf]
    %v354 = vld [vmem:[%s3] sm:$0x1]
    %v356 = vlaneseq
    %v357 = vshrl.u32 %v356, 7
    %v358 = vsub.s32 0, %v357
    %v359 = vrot.slane %v354, %v358
    %v377 = vunpack.c.l.b16 %v338
    %v378 = vunpack.c.l.b16 %v339
    %v379 = vunpack.c.l.b16 %v340
    %v380 = vunpack.c.l.b16 %v341
    %v381 = vunpack.c.l.b16 %v342
    %v382 = vunpack.c.l.b16 %v343
    %v383 = vunpack.c.l.b16 %v344
    %v384 = vunpack.c.l.b16 %v345
    %v385 = vunpack.c.l.b16 %v346
    %v386 = vunpack.c.l.b16 %v347
    %v387 = vunpack.c.l.b16 %v348
    %v388 = vunpack.c.l.b16 %v349
    %v389 = vunpack.c.l.b16 %v350
    %v390 = vunpack.c.l.b16 %v351
    %v391 = vunpack.c.l.b16 %v352
    %v392 = vunpack.c.l.b16 %v353
    %v393 = vpack.c.b16 %v378, %v377
    %v394 = vpack.c.b16 %v380, %v379
    %v395 = vpack.c.b16 %v382, %v381
    %v396 = vpack.c.b16 %v384, %v383
    %v397 = vpack.c.b16 %v386, %v385
    %v398 = vpack.c.b16 %v388, %v387
    %v399 = vpack.c.b16 %v390, %v389
    %v400 = vpack.c.b16 %v392, %v391
    %409 = vmatprep.subr.bf16.mxu0 0
    %410 = vmatpush1.bf16.msra.mxu0 %v400
    %411 = vmatprep.subr.bf16.mxu0 0
    %412 = vmatpush1.bf16.msra.mxu0 %v399
    %413 = vmatprep.subr.bf16.mxu0 0
    %414 = vmatpush1.bf16.msra.mxu0 %v398
    %415 = vmatprep.subr.bf16.mxu0 0
    %416 = vmatpush1.bf16.msra.mxu0 %v397
    %417 = vmatprep.subr.bf16.mxu0 0
    %418 = vmatpush1.bf16.msra.mxu0 %v396
    %419 = vmatprep.subr.bf16.mxu0 0
    %420 = vmatpush1.bf16.msra.mxu0 %v395
    %421 = vmatprep.subr.bf16.mxu0 0
    %422 = vmatpush1.bf16.msra.mxu0 %v394
    %423 = vmatprep.subr.bf16.mxu0 0
    %424 = vmatpush1.bf16.msra.mxu0 %v393
    %425 = vmatprep.subr.bf16.mxu0 0
    %426 = vmatpush2.bf16.msra.mxu0 0
    %427 = vmatprep.subr.bf16.mxu0 0
    %428 = vmatpush2.bf16.msra.mxu0 0
    %429 = vmatprep.subr.bf16.mxu0 0
    %430 = vmatpush2.bf16.msra.mxu0 0
    %431 = vmatprep.subr.bf16.mxu0 0
    %432 = vmatpush2.bf16.msra.mxu0 0
    %433 = vmatprep.subr.bf16.mxu0 0
    %434 = vmatpush2.bf16.msra.mxu0 0
    %435 = vmatprep.subr.bf16.mxu0 0
    %436 = vmatpush2.bf16.msra.mxu0 0
    %437 = vmatprep.subr.bf16.mxu0 0
    %438 = vmatpush2.bf16.msra.mxu0 0
    %439 = vmatprep.subr.bf16.mxu0 0
    %440 = vmatpush2.bf16.msra.mxu0 0
    %441 = vmatprep.mubr.bf16.mxu0 0
    %442 = vmatmul.mubr.bf16.gmra.mxu0 %v330
    %v443 = vpop.f32.mrf.mxu0
    %v444 = vadd.f32 %v359, %v443
    %v445 = vpop.f32.mrf.mxu0
    %v446 = vpop.f32.mrf.mxu0
    %v447 = vadd.f32 %v359, %v446
    %v448 = vpop.f32.mrf.mxu0
    %449 = vmatprep.mubr.bf16.mxu0 0
    %450 = vmatmul.mubr.bf16.gmra.mxu0 %v331
    %v451 = vpop.f32.mrf.mxu0
    %v452 = vadd.f32 %v359, %v451
    %v453 = vpop.f32.mrf.mxu0
    %v454 = vpop.f32.mrf.mxu0
    %v455 = vadd.f32 %v359, %v454
    %v456 = vpop.f32.mrf.mxu0
    %457 = vmatprep.mubr.bf16.mxu0 0
    %458 = vmatmul.mubr.bf16.gmra.mxu0 %v332
    %v459 = vpop.f32.mrf.mxu0
    %v460 = vadd.f32 %v359, %v459
    %v461 = vpop.f32.mrf.mxu0
    %v462 = vpop.f32.mrf.mxu0
    %v463 = vadd.f32 %v359, %v462
    %v464 = vpop.f32.mrf.mxu0
    %465 = vmatprep.mubr.bf16.mxu0 0
    %466 = vmatmul.mubr.bf16.gmra.mxu0 %v333
    %v467 = vpop.f32.mrf.mxu0
    %v468 = vadd.f32 %v359, %v467
    %v469 = vpop.f32.mrf.mxu0
    %v470 = vpop.f32.mrf.mxu0
    %v471 = vadd.f32 %v359, %v470
    %v472 = vpop.f32.mrf.mxu0
    %473 = vmatprep.mubr.bf16.mxu0 0
    %474 = vmatmul.mubr.bf16.gmra.mxu0 %v334
    %v475 = vpop.f32.mrf.mxu0
    %v476 = vadd.f32 %v359, %v475
    %v477 = vpop.f32.mrf.mxu0
    %v478 = vpop.f32.mrf.mxu0
    %v479 = vadd.f32 %v359, %v478
    %v480 = vpop.f32.mrf.mxu0
    %481 = vmatprep.mubr.bf16.mxu0 0
    %482 = vmatmul.mubr.bf16.gmra.mxu0 %v335
    %v483 = vpop.f32.mrf.mxu0
    %v484 = vadd.f32 %v359, %v483
    %v485 = vpop.f32.mrf.mxu0
    %v486 = vpop.f32.mrf.mxu0
    %v487 = vadd.f32 %v359, %v486
    %v488 = vpop.f32.mrf.mxu0
    %489 = vmatprep.mubr.bf16.mxu0 0
    %490 = vmatmul.mubr.bf16.gmra.mxu0 %v336
    %v491 = vpop.f32.mrf.mxu0
    %v492 = vadd.f32 %v359, %v491
    %v493 = vpop.f32.mrf.mxu0
    %v494 = vpop.f32.mrf.mxu0
    %v495 = vadd.f32 %v359, %v494
    %v496 = vpop.f32.mrf.mxu0
    %497 = vmatprep.mubr.bf16.mxu0 0
    %498 = vmatmul.mubr.bf16.gmra.mxu0 %v337
    %v499 = vpop.f32.mrf.mxu0
    %v500 = vadd.f32 %v359, %v499
    %v501 = vpop.f32.mrf.mxu0
    %v502 = vpop.f32.mrf.mxu0
    %v503 = vadd.f32 %v359, %v502
    %v504 = vpop.f32.mrf.mxu0
    %505 = vdwg.mxu0
    %v506 = vxor.u32 %v444, 2147483648
    %v507 = vxor.u32 %v447, 2147483648
    %v508 = vxor.u32 %v452, 2147483648
    %v509 = vxor.u32 %v455, 2147483648
    %v510 = vxor.u32 %v460, 2147483648
    %v511 = vxor.u32 %v463, 2147483648
    %v512 = vxor.u32 %v468, 2147483648
    %v513 = vxor.u32 %v471, 2147483648
    %v514 = vxor.u32 %v476, 2147483648
    %v515 = vxor.u32 %v479, 2147483648
    %v516 = vxor.u32 %v484, 2147483648
    %v517 = vxor.u32 %v487, 2147483648
    %v518 = vxor.u32 %v492, 2147483648
    %v519 = vxor.u32 %v495, 2147483648
    %v520 = vxor.u32 %v500, 2147483648
    %v521 = vxor.u32 %v503, 2147483648
    %v522 = vmul.f32 %v506, 1.442695
    %v523 = vpow.pop %v522
    %v524 = vmul.f32 %v507, 1.442695
    %v525 = vpow.pop %v524
    %v526 = vmul.f32 %v508, 1.442695
    %v527 = vpow.pop %v526
    %v528 = vmul.f32 %v509, 1.442695
    %v529 = vpow.pop %v528
    %v530 = vmul.f32 %v510, 1.442695
    %v531 = vpow.pop %v530
    %v532 = vmul.f32 %v511, 1.442695
    %v533 = vpow.pop %v532
    %v534 = vmul.f32 %v512, 1.442695
    %v535 = vpow.pop %v534
    %v536 = vmul.f32 %v513, 1.442695
    %v537 = vpow.pop %v536
    %v538 = vmul.f32 %v514, 1.442695
    %v539 = vpow.pop %v538
    %v540 = vmul.f32 %v515, 1.442695
    %v541 = vpow.pop %v540
    %v542 = vmul.f32 %v516, 1.442695
    %v543 = vpow.pop %v542
    %v544 = vmul.f32 %v517, 1.442695
    %v545 = vpow.pop %v544
    %v546 = vmul.f32 %v518, 1.442695
    %v547 = vpow.pop %v546
    %v548 = vmul.f32 %v519, 1.442695
    %v549 = vpow.pop %v548
    %v550 = vmul.f32 %v520, 1.442695
    %v551 = vpow.pop %v550
    %v552 = vmul.f32 %v521, 1.442695
    %v553 = vpow.pop %v552
    %v554 = vadd.f32 %v523, 1.0
    %v555 = vadd.f32 %v525, 1.0
    %v556 = vadd.f32 %v527, 1.0
    %v557 = vadd.f32 %v529, 1.0
    %v558 = vadd.f32 %v531, 1.0
    %v559 = vadd.f32 %v533, 1.0
    %v560 = vadd.f32 %v535, 1.0
    %v561 = vadd.f32 %v537, 1.0
    %v562 = vadd.f32 %v539, 1.0
    %v563 = vadd.f32 %v541, 1.0
    %v564 = vadd.f32 %v543, 1.0
    %v565 = vadd.f32 %v545, 1.0
    %v566 = vadd.f32 %v547, 1.0
    %v567 = vadd.f32 %v549, 1.0
    %v568 = vadd.f32 %v551, 1.0
    %v569 = vadd.f32 %v553, 1.0
    %v570 = vrcp.pop %v554
    %v571 = vmul.f32 1.0, %v570
    %v572 = vrcp.pop %v555
    %v573 = vmul.f32 1.0, %v572
    %v574 = vrcp.pop %v556
    %v575 = vmul.f32 1.0, %v574
    %v576 = vrcp.pop %v557
    %v577 = vmul.f32 1.0, %v576
    %v578 = vrcp.pop %v558
    %v579 = vmul.f32 1.0, %v578
    %v580 = vrcp.pop %v559
    %v581 = vmul.f32 1.0, %v580
    %v582 = vrcp.pop %v560
    %v583 = vmul.f32 1.0, %v582
    %v584 = vrcp.pop %v561
    %v585 = vmul.f32 1.0, %v584
    %v586 = vrcp.pop %v562
    %v587 = vmul.f32 1.0, %v586
    %v588 = vrcp.pop %v563
    %v589 = vmul.f32 1.0, %v588
    %v590 = vrcp.pop %v564
    %v591 = vmul.f32 1.0, %v590
    %v592 = vrcp.pop %v565
    %v593 = vmul.f32 1.0, %v592
    %v594 = vrcp.pop %v566
    %v595 = vmul.f32 1.0, %v594
    %v596 = vrcp.pop %v567
    %v597 = vmul.f32 1.0, %v596
    %v598 = vrcp.pop %v568
    %v599 = vmul.f32 1.0, %v598
    %v600 = vrcp.pop %v569
    %v601 = vmul.f32 1.0, %v600
    %602 = vst [vmem:[%s4] sm:$0xff] %v571
    %603 = vst [vmem:[%s4 + $0x8] sm:$0xff] %v573
    %604 = vst [vmem:[%s4 + $0x10] sm:$0xff] %v575
    %605 = vst [vmem:[%s4 + $0x18] sm:$0xff] %v577
    %606 = vst [vmem:[%s4 + $0x20] sm:$0xff] %v579
    %607 = vst [vmem:[%s4 + $0x28] sm:$0xff] %v581
    %608 = vst [vmem:[%s4 + $0x30] sm:$0xff] %v583
    %609 = vst [vmem:[%s4 + $0x38] sm:$0xff] %v585
    %610 = vst [vmem:[%s4 + $0x40] sm:$0xff] %v587
    %611 = vst [vmem:[%s4 + $0x48] sm:$0xff] %v589
    %612 = vst [vmem:[%s4 + $0x50] sm:$0xff] %v591
    %613 = vst [vmem:[%s4 + $0x58] sm:$0xff] %v593
    %614 = vst [vmem:[%s4 + $0x60] sm:$0xff] %v595
    %615 = vst [vmem:[%s4 + $0x68] sm:$0xff] %v597
    %616 = vst [vmem:[%s4 + $0x70] sm:$0xff] %v599
    %617 = vst [vmem:[%s4 + $0x78] sm:$0xff] %v601
  $region25: #{gnn_model_forward.3} parent=0 // pred_fallthru
    _
  // Predicated region
  $region26: #{gnn_model_forward.3} parent=0 // pred_check
    _
  $region27: #{gnn_model_forward.3} parent=0 // pred_check_branch
    %619 = sbr.rel (0) target = $region29
  $region28: #{gnn_model_forward.3} parent=0 // pred_region
    _
  $region29: #{gnn_model_forward.3} parent=0 // pred_fallthru
    _
  // Predicated region
  $region30: #{gnn_model_forward.3} parent=0 // pred_check
    _
  $region31: #{gnn_model_forward.3} parent=0 // pred_check_branch
    %621 = sbr.rel (0) target = $region33
  $region32: #{gnn_model_forward.3} parent=0 // pred_region
    _
  $region33: #{gnn_model_forward.3} parent=0 // pred_fallthru
    _

// kernel: gnn_model_forward.2
$region0: #{gnn_model_forward.2}
  #allocation0 [shape = 'u32[]', space=smem, size = 0x4, offset = 0x4, fixed_abs, tag = 'smem constant byte address 0x4 - core index']
  #allocation1 [shape = 'u32[144,128]{1,0:T(1,128)}', space=vmem, size = 0x12000, scoped, tag = 'internal scratch']
  #allocation2 [shape = 'f32[128,128]{1,0:T(8,128)}', space=vmem, size = 0x10000, scoped, tag = 'scratch operand']
  %s0 = inlined_call_operand.vmem [shape: bf16[128,128], index: 0, kind: input, shape index: {}]
  %s1 = inlined_call_operand.vmem [shape: bf16[128,128], index: 1, kind: input, shape index: {}]
  %s2 = inlined_call_operand.vmem [shape: bf16[128,128], index: 2, kind: input, shape index: {}]
  %s3 = inlined_call_operand.vmem [shape: f32[1,128], index: 3, kind: input, shape index: {}]
  %s4 = inlined_call_operand.vmem [shape: bf16[128,128], index: 4, kind: output, shape index: {}]
  %s5 = sld [smem:[#allocation0]]
  $region34: #{gnn_model_forward.2} parent=0
    _
  %s7 = ssub.s32 1, %s5
  %s8 = scalar_select 0, %s7, %s5
  // Predicated region
  $region2: #{gnn_model_forward.2} parent=0 // pred_check
    _
  $region3: #{gnn_model_forward.2} parent=0 // pred_check_branch
    %10 = sbr.rel (0) target = $region5
  $region4: #{gnn_model_forward.2} parent=0 // pred_region
    _
  $region5: #{gnn_model_forward.2} parent=0 // pred_fallthru
    _
  // Predicated region
  $region6: #{gnn_model_forward.2} parent=0 // pred_check
    _
  $region7: #{gnn_model_forward.2} parent=0 // pred_check_branch
    %12 = sbr.rel (0) target = $region9
  $region8: #{gnn_model_forward.2} parent=0 // pred_region
    _
  $region9: #{gnn_model_forward.2} parent=0 // pred_fallthru
    _
  // Predicated region
  $region10: #{gnn_model_forward.2} parent=0 // pred_check
    _
  $region11: #{gnn_model_forward.2} parent=0 // pred_check_branch
    %14 = sbr.rel (0) target = $region13
  $region12: #{gnn_model_forward.2} parent=0 // pred_region
    _
  $region13: #{gnn_model_forward.2} parent=0 // pred_fallthru
    _
  // Predicated region
  $region14: #{gnn_model_forward.2} parent=0 // pred_check
    _
  $region15: #{gnn_model_forward.2} parent=0 // pred_check_branch
    %16 = sbr.rel (0) target = $region17
  $region16: #{gnn_model_forward.2} parent=0 // pred_region
    _
  $region17: #{gnn_model_forward.2} parent=0 // pred_fallthru
    _
  %p18 = scmp.eq.s32.totalorder 0, 0
  // Predicated region
  $region18: #{gnn_model_forward.2} parent=0 // pred_check
    %p19 = pneg %p18
  $region19: #{gnn_model_forward.2} parent=0 // pred_check_branch
    %21 = sbr.rel (%p19) target = $region21
  $region20: #{gnn_model_forward.2} parent=0 // pred_region
    %22 = vst [vmem:[#allocation2] sm:$0xff] 0.0
    %23 = vst [vmem:[#allocation2 + $0x8] sm:$0xff] 0.0
    %24 = vst [vmem:[#allocation2 + $0x10] sm:$0xff] 0.0
    %25 = vst [vmem:[#allocation2 + $0x18] sm:$0xff] 0.0
    %26 = vst [vmem:[#allocation2 + $0x20] sm:$0xff] 0.0
    %27 = vst [vmem:[#allocation2 + $0x28] sm:$0xff] 0.0
    %28 = vst [vmem:[#allocation2 + $0x30] sm:$0xff] 0.0
    %29 = vst [vmem:[#allocation2 + $0x38] sm:$0xff] 0.0
    %30 = vst [vmem:[#allocation2 + $0x40] sm:$0xff] 0.0
    %31 = vst [vmem:[#allocation2 + $0x48] sm:$0xff] 0.0
    %32 = vst [vmem:[#allocation2 + $0x50] sm:$0xff] 0.0
    %33 = vst [vmem:[#allocation2 + $0x58] sm:$0xff] 0.0
    %34 = vst [vmem:[#allocation2 + $0x60] sm:$0xff] 0.0
    %35 = vst [vmem:[#allocation2 + $0x68] sm:$0xff] 0.0
    %36 = vst [vmem:[#allocation2 + $0x70] sm:$0xff] 0.0
    %37 = vst [vmem:[#allocation2 + $0x78] sm:$0xff] 0.0
  $region21: #{gnn_model_forward.2} parent=0 // pred_fallthru
    _
  %v38 = vld [vmem:[#allocation2] sm:$0xff]
  %v39 = vld [vmem:[#allocation2 + $0x8] sm:$0xff]
  %v40 = vld [vmem:[#allocation2 + $0x10] sm:$0xff]
  %v41 = vld [vmem:[#allocation2 + $0x18] sm:$0xff]
  %v42 = vld [vmem:[#allocation2 + $0x20] sm:$0xff]
  %v43 = vld [vmem:[#allocation2 + $0x28] sm:$0xff]
  %v44 = vld [vmem:[#allocation2 + $0x30] sm:$0xff]
  %v45 = vld [vmem:[#allocation2 + $0x38] sm:$0xff]
  %v46 = vld [vmem:[#allocation2 + $0x40] sm:$0xff]
  %v47 = vld [vmem:[#allocation2 + $0x48] sm:$0xff]
  %v48 = vld [vmem:[#allocation2 + $0x50] sm:$0xff]
  %v49 = vld [vmem:[#allocation2 + $0x58] sm:$0xff]
  %v50 = vld [vmem:[#allocation2 + $0x60] sm:$0xff]
  %v51 = vld [vmem:[#allocation2 + $0x68] sm:$0xff]
  %v52 = vld [vmem:[#allocation2 + $0x70] sm:$0xff]
  %v53 = vld [vmem:[#allocation2 + $0x78] sm:$0xff]
  %v54 = vld [vmem:[%s0] sm:$0xf]
  %v55 = vld [vmem:[%s0 + $0x4] sm:$0xf]
  %v56 = vld [vmem:[%s0 + $0x8] sm:$0xf]
  %v57 = vld [vmem:[%s0 + $0xc] sm:$0xf]
  %v58 = vld [vmem:[%s0 + $0x10] sm:$0xf]
  %v59 = vld [vmem:[%s0 + $0x14] sm:$0xf]
  %v60 = vld [vmem:[%s0 + $0x18] sm:$0xf]
  %v61 = vld [vmem:[%s0 + $0x1c] sm:$0xf]
  %v62 = vld [vmem:[%s0 + $0x20] sm:$0xf]
  %v63 = vld [vmem:[%s0 + $0x24] sm:$0xf]
  %v64 = vld [vmem:[%s0 + $0x28] sm:$0xf]
  %v65 = vld [vmem:[%s0 + $0x2c] sm:$0xf]
  %v66 = vld [vmem:[%s0 + $0x30] sm:$0xf]
  %v67 = vld [vmem:[%s0 + $0x34] sm:$0xf]
  %v68 = vld [vmem:[%s0 + $0x38] sm:$0xf]
  %v69 = vld [vmem:[%s0 + $0x3c] sm:$0xf]
  %v70 = vld [vmem:[%s1] sm:$0xf]
  %v71 = vld [vmem:[%s1 + $0x4] sm:$0xf]
  %v72 = vld [vmem:[%s1 + $0x8] sm:$0xf]
  %v73 = vld [vmem:[%s1 + $0xc] sm:$0xf]
  %v74 = vld [vmem:[%s1 + $0x10] sm:$0xf]
  %v75 = vld [vmem:[%s1 + $0x14] sm:$0xf]
  %v76 = vld [vmem:[%s1 + $0x18] sm:$0xf]
  %v77 = vld [vmem:[%s1 + $0x1c] sm:$0xf]
  %v78 = vld [vmem:[%s1 + $0x20] sm:$0xf]
  %v79 = vld [vmem:[%s1 + $0x24] sm:$0xf]
  %v80 = vld [vmem:[%s1 + $0x28] sm:$0xf]
  %v81 = vld [vmem:[%s1 + $0x2c] sm:$0xf]
  %v82 = vld [vmem:[%s1 + $0x30] sm:$0xf]
  %v83 = vld [vmem:[%s1 + $0x34] sm:$0xf]
  %v84 = vld [vmem:[%s1 + $0x38] sm:$0xf]
  %v85 = vld [vmem:[%s1 + $0x3c] sm:$0xf]
  %v102 = vunpack.c.l.b16 %v54
  %v103 = vunpack.c.l.b16 %v55
  %v104 = vunpack.c.l.b16 %v56
  %v105 = vunpack.c.l.b16 %v57
  %v106 = vunpack.c.l.b16 %v58
  %v107 = vunpack.c.l.b16 %v59
  %v108 = vunpack.c.l.b16 %v60
  %v109 = vunpack.c.l.b16 %v61
  %v110 = vunpack.c.l.b16 %v62
  %v111 = vunpack.c.l.b16 %v63
  %v112 = vunpack.c.l.b16 %v64
  %v113 = vunpack.c.l.b16 %v65
  %v114 = vunpack.c.l.b16 %v66
  %v115 = vunpack.c.l.b16 %v67
  %v116 = vunpack.c.l.b16 %v68
  %v117 = vunpack.c.l.b16 %v69
  %v118 = vpack.c.b16 %v103, %v102
  %v119 = vpack.c.b16 %v105, %v104
  %v120 = vpack.c.b16 %v107, %v106
  %v121 = vpack.c.b16 %v109, %v108
  %v122 = vpack.c.b16 %v111, %v110
  %v123 = vpack.c.b16 %v113, %v112
  %v124 = vpack.c.b16 %v115, %v114
  %v125 = vpack.c.b16 %v117, %v116
  %v150 = vunpack.c.l.b16 %v70
  %v151 = vunpack.c.l.b16 %v71
  %v152 = vunpack.c.l.b16 %v72
  %v153 = vunpack.c.l.b16 %v73
  %v154 = vunpack.c.l.b16 %v74
  %v155 = vunpack.c.l.b16 %v75
  %v156 = vunpack.c.l.b16 %v76
  %v157 = vunpack.c.l.b16 %v77
  %v158 = vunpack.c.l.b16 %v78
  %v159 = vunpack.c.l.b16 %v79
  %v160 = vunpack.c.l.b16 %v80
  %v161 = vunpack.c.l.b16 %v81
  %v162 = vunpack.c.l.b16 %v82
  %v163 = vunpack.c.l.b16 %v83
  %v164 = vunpack.c.l.b16 %v84
  %v165 = vunpack.c.l.b16 %v85
  %v166 = vpack.c.b16 %v151, %v150
  %v167 = vpack.c.b16 %v153, %v152
  %v168 = vpack.c.b16 %v155, %v154
  %v169 = vpack.c.b16 %v157, %v156
  %v170 = vpack.c.b16 %v159, %v158
  %v171 = vpack.c.b16 %v161, %v160
  %v172 = vpack.c.b16 %v163, %v162
  %v173 = vpack.c.b16 %v165, %v164
  %182 = vmatprep.subr.bf16.mxu0 0
  %183 = vmatpush1.bf16.msra.mxu0 %v173
  %184 = vmatprep.subr.bf16.mxu0 0
  %185 = vmatpush1.bf16.msra.mxu0 %v172
  %186 = vmatprep.subr.bf16.mxu0 0
  %187 = vmatpush1.bf16.msra.mxu0 %v171
  %188 = vmatprep.subr.bf16.mxu0 0
  %189 = vmatpush1.bf16.msra.mxu0 %v170
  %190 = vmatprep.subr.bf16.mxu0 0
  %191 = vmatpush1.bf16.msra.mxu0 %v169
  %192 = vmatprep.subr.bf16.mxu0 0
  %193 = vmatpush1.bf16.msra.mxu0 %v168
  %194 = vmatprep.subr.bf16.mxu0 0
  %195 = vmatpush1.bf16.msra.mxu0 %v167
  %196 = vmatprep.subr.bf16.mxu0 0
  %197 = vmatpush1.bf16.msra.mxu0 %v166
  %198 = vmatprep.subr.bf16.mxu0 0
  %199 = vmatpush2.bf16.msra.mxu0 0
  %200 = vmatprep.subr.bf16.mxu0 0
  %201 = vmatpush2.bf16.msra.mxu0 0
  %202 = vmatprep.subr.bf16.mxu0 0
  %203 = vmatpush2.bf16.msra.mxu0 0
  %204 = vmatprep.subr.bf16.mxu0 0
  %205 = vmatpush2.bf16.msra.mxu0 0
  %206 = vmatprep.subr.bf16.mxu0 0
  %207 = vmatpush2.bf16.msra.mxu0 0
  %208 = vmatprep.subr.bf16.mxu0 0
  %209 = vmatpush2.bf16.msra.mxu0 0
  %210 = vmatprep.subr.bf16.mxu0 0
  %211 = vmatpush2.bf16.msra.mxu0 0
  %212 = vmatprep.subr.bf16.mxu0 0
  %213 = vmatpush2.bf16.msra.mxu0 0
  %214 = vmatprep.mubr.bf16.mxu0 0
  %215 = vmatmul.mubr.bf16.gmra.mxu0 %v118
  %v216 = vpop.f32.mrf.mxu0
  %v217 = vadd.f32 0.0, %v216
  %v218 = vpop.f32.mrf.mxu0
  %v219 = vpop.f32.mrf.mxu0
  %v220 = vadd.f32 0.0, %v219
  %v221 = vpop.f32.mrf.mxu0
  %222 = vmatprep.mubr.bf16.mxu0 0
  %223 = vmatmul.mubr.bf16.gmra.mxu0 %v119
  %v224 = vpop.f32.mrf.mxu0
  %v225 = vadd.f32 0.0, %v224
  %v226 = vpop.f32.mrf.mxu0
  %v227 = vpop.f32.mrf.mxu0
  %v228 = vadd.f32 0.0, %v227
  %v229 = vpop.f32.mrf.mxu0
  %230 = vmatprep.mubr.bf16.mxu0 0
  %231 = vmatmul.mubr.bf16.gmra.mxu0 %v120
  %v232 = vpop.f32.mrf.mxu0
  %v233 = vadd.f32 0.0, %v232
  %v234 = vpop.f32.mrf.mxu0
  %v235 = vpop.f32.mrf.mxu0
  %v236 = vadd.f32 0.0, %v235
  %v237 = vpop.f32.mrf.mxu0
  %238 = vmatprep.mubr.bf16.mxu0 0
  %239 = vmatmul.mubr.bf16.gmra.mxu0 %v121
  %v240 = vpop.f32.mrf.mxu0
  %v241 = vadd.f32 0.0, %v240
  %v242 = vpop.f32.mrf.mxu0
  %v243 = vpop.f32.mrf.mxu0
  %v244 = vadd.f32 0.0, %v243
  %v245 = vpop.f32.mrf.mxu0
  %246 = vmatprep.mubr.bf16.mxu0 0
  %247 = vmatmul.mubr.bf16.gmra.mxu0 %v122
  %v248 = vpop.f32.mrf.mxu0
  %v249 = vadd.f32 0.0, %v248
  %v250 = vpop.f32.mrf.mxu0
  %v251 = vpop.f32.mrf.mxu0
  %v252 = vadd.f32 0.0, %v251
  %v253 = vpop.f32.mrf.mxu0
  %254 = vmatprep.mubr.bf16.mxu0 0
  %255 = vmatmul.mubr.bf16.gmra.mxu0 %v123
  %v256 = vpop.f32.mrf.mxu0
  %v257 = vadd.f32 0.0, %v256
  %v258 = vpop.f32.mrf.mxu0
  %v259 = vpop.f32.mrf.mxu0
  %v260 = vadd.f32 0.0, %v259
  %v261 = vpop.f32.mrf.mxu0
  %262 = vmatprep.mubr.bf16.mxu0 0
  %263 = vmatmul.mubr.bf16.gmra.mxu0 %v124
  %v264 = vpop.f32.mrf.mxu0
  %v265 = vadd.f32 0.0, %v264
  %v266 = vpop.f32.mrf.mxu0
  %v267 = vpop.f32.mrf.mxu0
  %v268 = vadd.f32 0.0, %v267
  %v269 = vpop.f32.mrf.mxu0
  %270 = vmatprep.mubr.bf16.mxu0 0
  %271 = vmatmul.mubr.bf16.gmra.mxu0 %v125
  %v272 = vpop.f32.mrf.mxu0
  %v273 = vadd.f32 0.0, %v272
  %v274 = vpop.f32.mrf.mxu0
  %v275 = vpop.f32.mrf.mxu0
  %v276 = vadd.f32 0.0, %v275
  %v277 = vpop.f32.mrf.mxu0
  %278 = vdwg.mxu0
  %v279 = vadd.f32 %v38, %v217
  %v280 = vadd.f32 %v39, %v220
  %v281 = vadd.f32 %v40, %v225
  %v282 = vadd.f32 %v41, %v228
  %v283 = vadd.f32 %v42, %v233
  %v284 = vadd.f32 %v43, %v236
  %v285 = vadd.f32 %v44, %v241
  %v286 = vadd.f32 %v45, %v244
  %v287 = vadd.f32 %v46, %v249
  %v288 = vadd.f32 %v47, %v252
  %v289 = vadd.f32 %v48, %v257
  %v290 = vadd.f32 %v49, %v260
  %v291 = vadd.f32 %v50, %v265
  %v292 = vadd.f32 %v51, %v268
  %v293 = vadd.f32 %v52, %v273
  %v294 = vadd.f32 %v53, %v276
  %295 = vst [vmem:[#allocation2] sm:$0xff] %v279
  %296 = vst [vmem:[#allocation2 + $0x8] sm:$0xff] %v280
  %297 = vst [vmem:[#allocation2 + $0x10] sm:$0xff] %v281
  %298 = vst [vmem:[#allocation2 + $0x18] sm:$0xff] %v282
  %299 = vst [vmem:[#allocation2 + $0x20] sm:$0xff] %v283
  %300 = vst [vmem:[#allocation2 + $0x28] sm:$0xff] %v284
  %301 = vst [vmem:[#allocation2 + $0x30] sm:$0xff] %v285
  %302 = vst [vmem:[#allocation2 + $0x38] sm:$0xff] %v286
  %303 = vst [vmem:[#allocation2 + $0x40] sm:$0xff] %v287
  %304 = vst [vmem:[#allocation2 + $0x48] sm:$0xff] %v288
  %305 = vst [vmem:[#allocation2 + $0x50] sm:$0xff] %v289
  %306 = vst [vmem:[#allocation2 + $0x58] sm:$0xff] %v290
  %307 = vst [vmem:[#allocation2 + $0x60] sm:$0xff] %v291
  %308 = vst [vmem:[#allocation2 + $0x68] sm:$0xff] %v292
  %309 = vst [vmem:[#allocation2 + $0x70] sm:$0xff] %v293
  %310 = vst [vmem:[#allocation2 + $0x78] sm:$0xff] %v294
  // Predicated region
  $region22: #{gnn_model_forward.2} parent=0 // pred_check
    %p311 = pneg %p18
  $region23: #{gnn_model_forward.2} parent=0 // pred_check_branch
    %313 = sbr.rel (%p311) target = $region25
  $region24: #{gnn_model_forward.2} parent=0 // pred_region
    %v314 = vld [vmem:[#allocation2] sm:$0xff]
    %v315 = vld [vmem:[#allocation2 + $0x8] sm:$0xff]
    %v316 = vld [vmem:[#allocation2 + $0x10] sm:$0xff]
    %v317 = vld [vmem:[#allocation2 + $0x18] sm:$0xff]
    %v318 = vld [vmem:[#allocation2 + $0x20] sm:$0xff]
    %v319 = vld [vmem:[#allocation2 + $0x28] sm:$0xff]
    %v320 = vld [vmem:[#allocation2 + $0x30] sm:$0xff]
    %v321 = vld [vmem:[#allocation2 + $0x38] sm:$0xff]
    %v322 = vld [vmem:[#allocation2 + $0x40] sm:$0xff]
    %v323 = vld [vmem:[#allocation2 + $0x48] sm:$0xff]
    %v324 = vld [vmem:[#allocation2 + $0x50] sm:$0xff]
    %v325 = vld [vmem:[#allocation2 + $0x58] sm:$0xff]
    %v326 = vld [vmem:[#allocation2 + $0x60] sm:$0xff]
    %v327 = vld [vmem:[#allocation2 + $0x68] sm:$0xff]
    %v328 = vld [vmem:[#allocation2 + $0x70] sm:$0xff]
    %v329 = vld [vmem:[#allocation2 + $0x78] sm:$0xff]
    %v330 = vpack.c.bf16 %v315, %v314
    %v331 = vpack.c.bf16 %v317, %v316
    %v332 = vpack.c.bf16 %v319, %v318
    %v333 = vpack.c.bf16 %v321, %v320
    %v334 = vpack.c.bf16 %v323, %v322
    %v335 = vpack.c.bf16 %v325, %v324
    %v336 = vpack.c.bf16 %v327, %v326
    %v337 = vpack.c.bf16 %v329, %v328
    %v338 = vld [vmem:[%s2] sm:$0xf]
    %v339 = vld [vmem:[%s2 + $0x4] sm:$0xf]
    %v340 = vld [vmem:[%s2 + $0x8] sm:$0xf]
    %v341 = vld [vmem:[%s2 + $0xc] sm:$0xf]
    %v342 = vld [vmem:[%s2 + $0x10] sm:$0xf]
    %v343 = vld [vmem:[%s2 + $0x14] sm:$0xf]
    %v344 = vld [vmem:[%s2 + $0x18] sm:$0xf]
    %v345 = vld [vmem:[%s2 + $0x1c] sm:$0xf]
    %v346 = vld [vmem:[%s2 + $0x20] sm:$0xf]
    %v347 = vld [vmem:[%s2 + $0x24] sm:$0xf]
    %v348 = vld [vmem:[%s2 + $0x28] sm:$0xf]
    %v349 = vld [vmem:[%s2 + $0x2c] sm:$0xf]
    %v350 = vld [vmem:[%s2 + $0x30] sm:$0xf]
    %v351 = vld [vmem:[%s2 + $0x34] sm:$0xf]
    %v352 = vld [vmem:[%s2 + $0x38] sm:$0xf]
    %v353 = vld [vmem:[%s2 + $0x3c] sm:$0xf]
    %v354 = vld [vmem:[%s3] sm:$0x1]
    %v356 = vlaneseq
    %v357 = vshrl.u32 %v356, 7
    %v358 = vsub.s32 0, %v357
    %v359 = vrot.slane %v354, %v358
    %v377 = vunpack.c.l.b16 %v338
    %v378 = vunpack.c.l.b16 %v339
    %v379 = vunpack.c.l.b16 %v340
    %v380 = vunpack.c.l.b16 %v341
    %v381 = vunpack.c.l.b16 %v342
    %v382 = vunpack.c.l.b16 %v343
    %v383 = vunpack.c.l.b16 %v344
    %v384 = vunpack.c.l.b16 %v345
    %v385 = vunpack.c.l.b16 %v346
    %v386 = vunpack.c.l.b16 %v347
    %v387 = vunpack.c.l.b16 %v348
    %v388 = vunpack.c.l.b16 %v349
    %v389 = vunpack.c.l.b16 %v350
    %v390 = vunpack.c.l.b16 %v351
    %v391 = vunpack.c.l.b16 %v352
    %v392 = vunpack.c.l.b16 %v353
    %v393 = vpack.c.b16 %v378, %v377
    %v394 = vpack.c.b16 %v380, %v379
    %v395 = vpack.c.b16 %v382, %v381
    %v396 = vpack.c.b16 %v384, %v383
    %v397 = vpack.c.b16 %v386, %v385
    %v398 = vpack.c.b16 %v388, %v387
    %v399 = vpack.c.b16 %v390, %v389
    %v400 = vpack.c.b16 %v392, %v391
    %409 = vmatprep.subr.bf16.mxu0 0
    %410 = vmatpush1.bf16.msra.mxu0 %v400
    %411 = vmatprep.subr.bf16.mxu0 0
    %412 = vmatpush1.bf16.msra.mxu0 %v399
    %413 = vmatprep.subr.bf16.mxu0 0
    %414 = vmatpush1.bf16.msra.mxu0 %v398
    %415 = vmatprep.subr.bf16.mxu0 0
    %416 = vmatpush1.bf16.msra.mxu0 %v397
    %417 = vmatprep.subr.bf16.mxu0 0
    %418 = vmatpush1.bf16.msra.mxu0 %v396
    %419 = vmatprep.subr.bf16.mxu0 0
    %420 = vmatpush1.bf16.msra.mxu0 %v395
    %421 = vmatprep.subr.bf16.mxu0 0
    %422 = vmatpush1.bf16.msra.mxu0 %v394
    %423 = vmatprep.subr.bf16.mxu0 0
    %424 = vmatpush1.bf16.msra.mxu0 %v393
    %425 = vmatprep.subr.bf16.mxu0 0
    %426 = vmatpush2.bf16.msra.mxu0 0
    %427 = vmatprep.subr.bf16.mxu0 0
    %428 = vmatpush2.bf16.msra.mxu0 0
    %429 = vmatprep.subr.bf16.mxu0 0
    %430 = vmatpush2.bf16.msra.mxu0 0
    %431 = vmatprep.subr.bf16.mxu0 0
    %432 = vmatpush2.bf16.msra.mxu0 0
    %433 = vmatprep.subr.bf16.mxu0 0
    %434 = vmatpush2.bf16.msra.mxu0 0
    %435 = vmatprep.subr.bf16.mxu0 0
    %436 = vmatpush2.bf16.msra.mxu0 0
    %437 = vmatprep.subr.bf16.mxu0 0
    %438 = vmatpush2.bf16.msra.mxu0 0
    %439 = vmatprep.subr.bf16.mxu0 0
    %440 = vmatpush2.bf16.msra.mxu0 0
    %441 = vmatprep.mubr.bf16.mxu0 0
    %442 = vmatmul.mubr.bf16.gmra.mxu0 %v330
    %v443 = vpop.f32.mrf.mxu0
    %v444 = vadd.f32 %v359, %v443
    %v445 = vpop.f32.mrf.mxu0
    %v446 = vpop.f32.mrf.mxu0
    %v447 = vadd.f32 %v359, %v446
    %v448 = vpop.f32.mrf.mxu0
    %449 = vmatprep.mubr.bf16.mxu0 0
    %450 = vmatmul.mubr.bf16.gmra.mxu0 %v331
    %v451 = vpop.f32.mrf.mxu0
    %v452 = vadd.f32 %v359, %v451
    %v453 = vpop.f32.mrf.mxu0
    %v454 = vpop.f32.mrf.mxu0
    %v455 = vadd.f32 %v359, %v454
    %v456 = vpop.f32.mrf.mxu0
    %457 = vmatprep.mubr.bf16.mxu0 0
    %458 = vmatmul.mubr.bf16.gmra.mxu0 %v332
    %v459 = vpop.f32.mrf.mxu0
    %v460 = vadd.f32 %v359, %v459
    %v461 = vpop.f32.mrf.mxu0
    %v462 = vpop.f32.mrf.mxu0
    %v463 = vadd.f32 %v359, %v462
    %v464 = vpop.f32.mrf.mxu0
    %465 = vmatprep.mubr.bf16.mxu0 0
    %466 = vmatmul.mubr.bf16.gmra.mxu0 %v333
    %v467 = vpop.f32.mrf.mxu0
    %v468 = vadd.f32 %v359, %v467
    %v469 = vpop.f32.mrf.mxu0
    %v470 = vpop.f32.mrf.mxu0
    %v471 = vadd.f32 %v359, %v470
    %v472 = vpop.f32.mrf.mxu0
    %473 = vmatprep.mubr.bf16.mxu0 0
    %474 = vmatmul.mubr.bf16.gmra.mxu0 %v334
    %v475 = vpop.f32.mrf.mxu0
    %v476 = vadd.f32 %v359, %v475
    %v477 = vpop.f32.mrf.mxu0
    %v478 = vpop.f32.mrf.mxu0
    %v479 = vadd.f32 %v359, %v478
    %v480 = vpop.f32.mrf.mxu0
    %481 = vmatprep.mubr.bf16.mxu0 0
    %482 = vmatmul.mubr.bf16.gmra.mxu0 %v335
    %v483 = vpop.f32.mrf.mxu0
    %v484 = vadd.f32 %v359, %v483
    %v485 = vpop.f32.mrf.mxu0
    %v486 = vpop.f32.mrf.mxu0
    %v487 = vadd.f32 %v359, %v486
    %v488 = vpop.f32.mrf.mxu0
    %489 = vmatprep.mubr.bf16.mxu0 0
    %490 = vmatmul.mubr.bf16.gmra.mxu0 %v336
    %v491 = vpop.f32.mrf.mxu0
    %v492 = vadd.f32 %v359, %v491
    %v493 = vpop.f32.mrf.mxu0
    %v494 = vpop.f32.mrf.mxu0
    %v495 = vadd.f32 %v359, %v494
    %v496 = vpop.f32.mrf.mxu0
    %497 = vmatprep.mubr.bf16.mxu0 0
    %498 = vmatmul.mubr.bf16.gmra.mxu0 %v337
    %v499 = vpop.f32.mrf.mxu0
    %v500 = vadd.f32 %v359, %v499
    %v501 = vpop.f32.mrf.mxu0
    %v502 = vpop.f32.mrf.mxu0
    %v503 = vadd.f32 %v359, %v502
    %v504 = vpop.f32.mrf.mxu0
    %505 = vdwg.mxu0
    %v506 = vmax.f32 %v444, 0.0
    %v507 = vmax.f32 %v447, 0.0
    %v508 = vmax.f32 %v452, 0.0
    %v509 = vmax.f32 %v455, 0.0
    %v510 = vmax.f32 %v460, 0.0
    %v511 = vmax.f32 %v463, 0.0
    %v512 = vmax.f32 %v468, 0.0
    %v513 = vmax.f32 %v471, 0.0
    %v514 = vmax.f32 %v476, 0.0
    %v515 = vmax.f32 %v479, 0.0
    %v516 = vmax.f32 %v484, 0.0
    %v517 = vmax.f32 %v487, 0.0
    %v518 = vmax.f32 %v492, 0.0
    %v519 = vmax.f32 %v495, 0.0
    %v520 = vmax.f32 %v500, 0.0
    %v521 = vmax.f32 %v503, 0.0
    %v522 = vpack.c.bf16 %v507, %v506
    %v523 = vpack.c.bf16 %v509, %v508
    %v524 = vpack.c.bf16 %v511, %v510
    %v525 = vpack.c.bf16 %v513, %v512
    %v526 = vpack.c.bf16 %v515, %v514
    %v527 = vpack.c.bf16 %v517, %v516
    %v528 = vpack.c.bf16 %v519, %v518
    %v529 = vpack.c.bf16 %v521, %v520
    %v538 = vunpack.c.l.b16 %v522
    %v539 = vunpack.c.h.b16 %v522
    %v540 = vunpack.c.l.b16 %v523
    %v541 = vunpack.c.h.b16 %v523
    %v542 = vunpack.c.l.b16 %v524
    %v543 = vunpack.c.h.b16 %v524
    %v544 = vunpack.c.l.b16 %v525
    %v545 = vunpack.c.h.b16 %v525
    %v546 = vunpack.c.l.b16 %v526
    %v547 = vunpack.c.h.b16 %v526
    %v548 = vunpack.c.l.b16 %v527
    %v549 = vunpack.c.h.b16 %v527
    %v550 = vunpack.c.l.b16 %v528
    %v551 = vunpack.c.h.b16 %v528
    %v552 = vunpack.c.l.b16 %v529
    %v553 = vunpack.c.h.b16 %v529
    %v554 = vpack.c.b16 %v538, %v538
    %v555 = vpack.c.b16 %v539, %v539
    %v556 = vpack.c.b16 %v540, %v540
    %v557 = vpack.c.b16 %v541, %v541
    %v558 = vpack.c.b16 %v542, %v542
    %v559 = vpack.c.b16 %v543, %v543
    %v560 = vpack.c.b16 %v544, %v544
    %v561 = vpack.c.b16 %v545, %v545
    %v562 = vpack.c.b16 %v546, %v546
    %v563 = vpack.c.b16 %v547, %v547
    %v564 = vpack.c.b16 %v548, %v548
    %v565 = vpack.c.b16 %v549, %v549
    %v566 = vpack.c.b16 %v550, %v550
    %v567 = vpack.c.b16 %v551, %v551
    %v568 = vpack.c.b16 %v552, %v552
    %v569 = vpack.c.b16 %v553, %v553
    %586 = vst [vmem:[%s4] sm:$0xf] %v554
    %587 = vst [vmem:[%s4 + $0x4] sm:$0xf] %v555
    %588 = vst [vmem:[%s4 + $0x8] sm:$0xf] %v556
    %589 = vst [vmem:[%s4 + $0xc] sm:$0xf] %v557
    %590 = vst [vmem:[%s4 + $0x10] sm:$0xf] %v558
    %591 = vst [vmem:[%s4 + $0x14] sm:$0xf] %v559
    %592 = vst [vmem:[%s4 + $0x18] sm:$0xf] %v560
    %593 = vst [vmem:[%s4 + $0x1c] sm:$0xf] %v561
    %594 = vst [vmem:[%s4 + $0x20] sm:$0xf] %v562
    %595 = vst [vmem:[%s4 + $0x24] sm:$0xf] %v563
    %596 = vst [vmem:[%s4 + $0x28] sm:$0xf] %v564
    %597 = vst [vmem:[%s4 + $0x2c] sm:$0xf] %v565
    %598 = vst [vmem:[%s4 + $0x30] sm:$0xf] %v566
    %599 = vst [vmem:[%s4 + $0x34] sm:$0xf] %v567
    %600 = vst [vmem:[%s4 + $0x38] sm:$0xf] %v568
    %601 = vst [vmem:[%s4 + $0x3c] sm:$0xf] %v569
  $region25: #{gnn_model_forward.2} parent=0 // pred_fallthru
    _
  // Predicated region
  $region26: #{gnn_model_forward.2} parent=0 // pred_check
    _
  $region27: #{gnn_model_forward.2} parent=0 // pred_check_branch
    %603 = sbr.rel (0) target = $region29
  $region28: #{gnn_model_forward.2} parent=0 // pred_region
    _
  $region29: #{gnn_model_forward.2} parent=0 // pred_fallthru
    _
  // Predicated region
  $region30: #{gnn_model_forward.2} parent=0 // pred_check
    _
  $region31: #{gnn_model_forward.2} parent=0 // pred_check_branch
    %605 = sbr.rel (0) target = $region33
  $region32: #{gnn_model_forward.2} parent=0 // pred_region
    _
  $region33: #{gnn_model_forward.2} parent=0 // pred_fallthru
    _

</llo_original>
